<compile_context>
chip_gen: v7x
topology: tpu7x:2x2x1
jax: 0.10.0
libtpu: 0.0.40
codegen_flags: <defaults>
</compile_context>

<pallas_src>
import functools

import jax
import jax.numpy as jnp
from jax.experimental import pallas as pl
from jax.experimental.pallas import tpu as pltpu


def _round_up(x, m):
    return ((x + m - 1) // m) * m


def _dual_task_loss_kernel(seg_ref, tgt_ref, edge_ref, num_ref, cnt_ref,
                           acc_num, acc_cnt, *,
                           threshold, ignore_index, hw, n_classes,
                           rows_per_tile, needs_tail_mask):
    j = pl.program_id(1)

    # Zero the dense vector accumulators at the start of each image's HW loop.
    @pl.when(j == 0)
    def _():
        acc_num[...] = jnp.zeros_like(acc_num)
        acc_cnt[...] = jnp.zeros_like(acc_cnt)

    # Native-dtype blocks; widen in-kernel (uint8 target -> int32 keeps 255 exact).
    tgt = tgt_ref[...].astype(jnp.int32)        # (S, 128)
    edge = edge_ref[...].astype(jnp.float32)    # (S, 128)

    # Pass 1: running per-pixel max over classes (dense (S,128) VPU ops).
    m = seg_ref[0].astype(jnp.float32)
    for c in range(1, n_classes):
        m = jnp.maximum(m, seg_ref[c].astype(jnp.float32))

    # Pass 2: running sum-exp and target-class logit; only (S,128) temporaries
    # stay live, so no (C, tile) exp intermediate round-trips through VMEM.
    sumexp = jnp.zeros(m.shape, jnp.float32)
    tgt_logit = jnp.zeros(m.shape, jnp.float32)
    for c in range(n_classes):
        x = seg_ref[c].astype(jnp.float32)
        sumexp = sumexp + jnp.exp(x - m)
        tgt_logit = jnp.where(tgt == c, x, tgt_logit)

    # Numerically stable per-pixel cross entropy.
    ce = m + jnp.log(sumexp) - tgt_logit        # (S, 128)

    full_sel = (edge > threshold) & (tgt != ignore_index)

    def _accumulate(sel):
        # Select (not multiply!) so NaN/inf from garbage tail lanes never
        # reaches the accumulators.
        acc_num[...] += jnp.where(sel, ce, 0.0)
        acc_cnt[...] += sel.astype(jnp.float32)

    if needs_tail_mask:
        is_last = j == pl.num_programs(1) - 1

        @pl.when(jnp.logical_not(is_last))
        def _():
            _accumulate(full_sel)

        @pl.when(is_last)
        def _():
            row = jax.lax.broadcasted_iota(jnp.int32, full_sel.shape, 0)
            lane = jax.lax.broadcasted_iota(jnp.int32, full_sel.shape, 1)
            pix = (j * rows_per_tile + row) * 128 + lane
            _accumulate(full_sel & (pix < hw))
    else:
        _accumulate(full_sel)

    # Single cross-lane reduction per image, on its last HW tile only.
    @pl.when(j == pl.num_programs(1) - 1)
    def _():
        num_ref[...] = jnp.sum(acc_num[...]).reshape(1, 1, 1)
        cnt_ref[...] = jnp.sum(acc_cnt[...]).reshape(1, 1, 1)


def dual_task_loss(seg, edge, target, *, threshold=0.8, ignore_index=255,
                   tile_hw=32768):
    """seg: (N,C,H,W) float, edge: (N,1,H,W) float, target: (N,H,W) int."""
    N, C, H, W = seg.shape
    HW = H * W
    HWp = _round_up(HW, 128)
    R = HWp // 128  # rows of 128 pixels

    # Keep NCHW order and native dtypes; reshapes are metadata-only when
    # HW % 128 == 0 (the common case).  Only pad the pixel axis if needed.
    seg3 = seg.reshape(N, C, HW)
    if not jnp.issubdtype(seg3.dtype, jnp.floating):
        seg3 = seg3.astype(jnp.float32)
    tgt3 = target.reshape(N, HW)
    edge3 = edge.reshape(N, HW)
    if HWp != HW:
        pad = HWp - HW
        seg3 = jnp.pad(seg3, ((0, 0), (0, 0), (0, pad)))
        tgt3 = jnp.pad(tgt3, ((0, 0), (0, pad)))
        edge3 = jnp.pad(edge3, ((0, 0), (0, pad)))
    seg4 = seg3.reshape(N, C, R, 128)
    tgt4 = tgt3.reshape(N, R, 128)
    edge4 = edge3.reshape(N, R, 128)

    # Rows-of-128 per pixel tile: as large as requested, (8,128)-legal
    # (multiple of 8 sublanes or the full extent), clamped to the image.
    S = max(1, min(int(tile_hw) // 128, R))
    if S != R:
        S = min(_round_up(S, 8), R)
    num_tiles = pl.cdiv(R, S)
    tile_pix = S * 128
    needs_tail_mask = (num_tiles * tile_pix) != HW

    kernel = functools.partial(
        _dual_task_loss_kernel,
        threshold=float(threshold),
        ignore_index=int(ignore_index),
        hw=HW,
        n_classes=C,
        rows_per_tile=S,
        needs_tail_mask=needs_tail_mask,
    )

    # VMEM footprint per step (double-buffered inputs + dense scratch); only
    # raise the scoped limit if a big tile actually needs it (v5e default 16 MiB).
    block_bytes = (C * tile_pix * seg4.dtype.itemsize
                   + tile_pix * tgt4.dtype.itemsize
                   + tile_pix * edge4.dtype.itemsize)
    vmem_need = 2 * block_bytes + 2 * tile_pix * 4 + (2 << 20)
    cp_kwargs = dict(dimension_semantics=("parallel", "arbitrary"))
    if vmem_need > (16 << 20):
        cp_kwargs["vmem_limit_bytes"] = int(min(vmem_need + (4 << 20), 100 << 20))

    bytes_accessed = (seg4.size * seg4.dtype.itemsize
                      + tgt4.size * tgt4.dtype.itemsize
                      + edge4.size * edge4.dtype.itemsize
                      + 2 * N * 4)
    cost = pl.CostEstimate(
        flops=7 * N * HW * C,
        transcendentals=N * HW * (C + 1),
        bytes_accessed=bytes_accessed,
    )

    num, cnt = pl.pallas_call(
        kernel,
        out_shape=(jax.ShapeDtypeStruct((N, 1, 1), jnp.float32),
                   jax.ShapeDtypeStruct((N, 1, 1), jnp.float32)),
        grid_spec=pltpu.PrefetchScalarGridSpec(
            num_scalar_prefetch=0,
            grid=(N, num_tiles),
            in_specs=[
                pl.BlockSpec((pl.Squeezed(), C, S, 128), lambda n, j: (n, 0, j, 0)),
                pl.BlockSpec((pl.Squeezed(), S, 128), lambda n, j: (n, j, 0)),
                pl.BlockSpec((pl.Squeezed(), S, 128), lambda n, j: (n, j, 0)),
            ],
            out_specs=(
                pl.BlockSpec((1, 1, 1), lambda n, j: (n, 0, 0)),
                pl.BlockSpec((1, 1, 1), lambda n, j: (n, 0, 0)),
            ),
            scratch_shapes=[
                pltpu.VMEM((S, 128), jnp.float32),   # masked-CE accumulator
                pltpu.VMEM((S, 128), jnp.float32),   # valid-edge count accum
            ],
        ),
        compiler_params=pltpu.CompilerParams(**cp_kwargs),
        cost_estimate=cost,
    )(seg4, tgt4, edge4)

    total_num = jnp.sum(num)
    total_cnt = jnp.sum(cnt)
    # loss = sum(ce[edge > thr]) / clamp(count, min=1)
    return (total_num / jnp.maximum(total_cnt, 1.0)).astype(jnp.float32)


def _reference(seg, edge, target, threshold=0.8, ignore_index=255):
    # Pure-JAX reference of the PyTorch forward, for sanity checking.
    logits = jnp.transpose(seg, (0, 2, 3, 1)).astype(jnp.float32)   # NHWC
    lse = jax.nn.logsumexp(logits, axis=-1)
    tgt_safe = jnp.where(target == ignore_index, 0, target).astype(jnp.int32)
    tgt_logit = jnp.take_along_axis(logits, tgt_safe[..., None], axis=-1)[..., 0]
    ce = lse - tgt_logit
    valid = target != ignore_index
    ce = jnp.where(valid, ce, 0.0)
    e = edge[:, 0].astype(jnp.float32)
    sel = e > threshold
    num = jnp.maximum(jnp.sum((sel & valid).astype(jnp.float32)), 1.0)
    return jnp.sum(jnp.where(sel, ce, 0.0)) / num


def _make_inputs(key, N, C, H, W, ignore_index):
    k1, k2, k3, k4 = jax.random.split(key, 4)
    seg = jax.random.normal(k1, (N, C, H, W), dtype=jnp.float32)
    edge = jax.random.uniform(k2, (N, 1, H, W), dtype=jnp.float32)
    target = jax.random.randint(k3, (N, H, W), 0, C, dtype=jnp.int32)
    ignore_mask = jax.random.uniform(k4, (N, H, W)) < 0.1
    target = jnp.where(ignore_mask, ignore_index, target).astype(jnp.int32)
    return seg, edge, target


if __name__ == "__main__":
    key = jax.random.PRNGKey(0)
    keys = jax.random.split(key, 3)
    ignore_index = 255
    threshold = 0.8

    # Case 1: HW a multiple of 128, single tile (no tail mask).
    seg, edge, target = _make_inputs(keys[0], 2, 4, 16, 16, ignore_index)
    loss = dual_task_loss(seg, edge, target,
                          threshold=threshold, ignore_index=ignore_index)
    loss = jax.block_until_ready(loss)
    ref = _reference(seg, edge, target, threshold, ignore_index)
    assert jnp.allclose(loss, ref, rtol=1e-5, atol=1e-5), (loss, ref)

    # Case 2: HW not a multiple of 128 (pad + last-tile mask path).
    seg, edge, target = _make_inputs(keys[1], 2, 4, 10, 12, ignore_index)
    loss = dual_task_loss(seg, edge, target,
                          threshold=threshold, ignore_index=ignore_index)
    loss = jax.block_until_ready(loss)
    ref = _reference(seg, edge, target, threshold, ignore_index)
    assert jnp.allclose(loss, ref, rtol=1e-5, atol=1e-5), (loss, ref)

    # Case 3: multiple HW tiles with a ragged last block (small tile_hw).
    seg, edge, target = _make_inputs(keys[2], 2, 4, 48, 48, ignore_index)
    loss = dual_task_loss(seg, edge, target, threshold=threshold,
                          ignore_index=ignore_index, tile_hw=1024)
    loss = jax.block_until_ready(loss)
    ref = _reference(seg, edge, target, threshold, ignore_index)
    assert jnp.allclose(loss, ref, rtol=1e-5, atol=1e-5), (loss, ref)

    print("KERNEL_OK")
</pallas_src>

<mosaic_0001>
module attributes {stable_mosaic.version = 11 : i64} {
  func.func @_dual_task_loss_kernel(%arg0: i32, %arg1: i32, %arg2: memref<1x4x2x128xf32, #tpu.memory_space<vmem>>, %arg3: memref<1x2x128xi32, #tpu.memory_space<vmem>>, %arg4: memref<1x2x128xf32, #tpu.memory_space<vmem>>, %arg5: memref<1x1x1xf32, #tpu.memory_space<vmem>>, %arg6: memref<1x1x1xf32, #tpu.memory_space<vmem>>, %arg7: memref<2x128xf32, #tpu.memory_space<vmem>>, %arg8: memref<2x128xf32, #tpu.memory_space<vmem>>) attributes {dimension_semantics = [#tpu.dimension_semantics<parallel>, #tpu.dimension_semantics<arbitrary>], iteration_bounds = array<i64: 2, 1>, scalar_prefetch = 0 : i64, scratch_operands = 2 : i64, tpu.core_type = #tpu.core_type<tc>, window_params = [{transform_indices = @transform_0, window_bounds = array<i64: 1, 4, 2, 128>}, {transform_indices = @transform_1, window_bounds = array<i64: 1, 2, 128>}, {transform_indices = @transform_2, window_bounds = array<i64: 1, 2, 128>}, {transform_indices = @transform_3, window_bounds = array<i64: 1, 1, 1>}, {transform_indices = @transform_4, window_bounds = array<i64: 1, 1, 1>}]} {
    %c0_i32 = arith.constant 0 : i32
    %0 = arith.cmpi eq, %arg1, %c0_i32 : i32
    %1 = arith.extui %0 : i1 to i32
    %c0_i32_0 = arith.constant 0 : i32
    %2 = arith.cmpi ne, %1, %c0_i32_0 : i32
    scf.if %2 {
      %cst_49 = arith.constant 0.000000e+00 : f32
      %73 = vector.broadcast %cst_49 : f32 to vector<2x128xf32>
      %c0_50 = arith.constant 0 : index
      %c0_51 = arith.constant 0 : index
      %74 = vector.load %arg7[%c0_50, %c0_51] : memref<2x128xf32, #tpu.memory_space<vmem>>, vector<2x128xf32>
      tpu.vector_store %arg7[%c0_50, %c0_51], %73 {strides = array<i32>} : memref<2x128xf32, #tpu.memory_space<vmem>>, vector<2x128xf32>,
      %cst_52 = arith.constant 0.000000e+00 : f32
      %75 = vector.broadcast %cst_52 : f32 to vector<2x128xf32>
      %c0_53 = arith.constant 0 : index
      %c0_54 = arith.constant 0 : index
      %76 = vector.load %arg8[%c0_53, %c0_54] : memref<2x128xf32, #tpu.memory_space<vmem>>, vector<2x128xf32>
      tpu.vector_store %arg8[%c0_53, %c0_54], %75 {strides = array<i32>} : memref<2x128xf32, #tpu.memory_space<vmem>>, vector<2x128xf32>,
    } else {
    }
    %c0 = arith.constant 0 : index
    %c0_1 = arith.constant 0 : index
    %c0_2 = arith.constant 0 : index
    %3 = vector.load %arg3[%c0, %c0_1, %c0_2] : memref<1x2x128xi32, #tpu.memory_space<vmem>>, vector<1x2x128xi32>
    %4 = vector.shape_cast %3 : vector<1x2x128xi32> to vector<2x128xi32>
    %c0_3 = arith.constant 0 : index
    %c0_4 = arith.constant 0 : index
    %c0_5 = arith.constant 0 : index
    %5 = vector.load %arg4[%c0_3, %c0_4, %c0_5] : memref<1x2x128xf32, #tpu.memory_space<vmem>>, vector<1x2x128xf32>
    %6 = vector.shape_cast %5 : vector<1x2x128xf32> to vector<2x128xf32>
    %c0_6 = arith.constant 0 : index
    %c0_7 = arith.constant 0 : index
    %c0_8 = arith.constant 0 : index
    %c0_9 = arith.constant 0 : index
    %7 = vector.load %arg2[%c0_6, %c0_7, %c0_8, %c0_9] : memref<1x4x2x128xf32, #tpu.memory_space<vmem>>, vector<1x1x2x128xf32>
    %8 = vector.shape_cast %7 : vector<1x1x2x128xf32> to vector<2x128xf32>
    %c0_10 = arith.constant 0 : index
    %c1 = arith.constant 1 : index
    %c0_11 = arith.constant 0 : index
    %c0_12 = arith.constant 0 : index
    %9 = vector.load %arg2[%c0_10, %c1, %c0_11, %c0_12] : memref<1x4x2x128xf32, #tpu.memory_space<vmem>>, vector<1x1x2x128xf32>
    %10 = vector.shape_cast %9 : vector<1x1x2x128xf32> to vector<2x128xf32>
    %11 = arith.maximumf %8, %10 : vector<2x128xf32>
    %c0_13 = arith.constant 0 : index
    %c2 = arith.constant 2 : index
    %c0_14 = arith.constant 0 : index
    %c0_15 = arith.constant 0 : index
    %12 = vector.load %arg2[%c0_13, %c2, %c0_14, %c0_15] : memref<1x4x2x128xf32, #tpu.memory_space<vmem>>, vector<1x1x2x128xf32>
    %13 = vector.shape_cast %12 : vector<1x1x2x128xf32> to vector<2x128xf32>
    %14 = arith.maximumf %11, %13 : vector<2x128xf32>
    %c0_16 = arith.constant 0 : index
    %c3 = arith.constant 3 : index
    %c0_17 = arith.constant 0 : index
    %c0_18 = arith.constant 0 : index
    %15 = vector.load %arg2[%c0_16, %c3, %c0_17, %c0_18] : memref<1x4x2x128xf32, #tpu.memory_space<vmem>>, vector<1x1x2x128xf32>
    %16 = vector.shape_cast %15 : vector<1x1x2x128xf32> to vector<2x128xf32>
    %17 = arith.maximumf %14, %16 : vector<2x128xf32>
    %cst = arith.constant 0.000000e+00 : f32
    %18 = vector.broadcast %cst : f32 to vector<2x128xf32>
    %cst_19 = arith.constant 0.000000e+00 : f32
    %19 = vector.broadcast %cst_19 : f32 to vector<2x128xf32>
    %c0_20 = arith.constant 0 : index
    %c0_21 = arith.constant 0 : index
    %c0_22 = arith.constant 0 : index
    %c0_23 = arith.constant 0 : index
    %20 = vector.load %arg2[%c0_20, %c0_21, %c0_22, %c0_23] : memref<1x4x2x128xf32, #tpu.memory_space<vmem>>, vector<1x1x2x128xf32>
    %21 = vector.shape_cast %20 : vector<1x1x2x128xf32> to vector<2x128xf32>
    %22 = arith.subf %21, %17 : vector<2x128xf32>
    %23 = math.exp %22 : vector<2x128xf32>
    %24 = arith.addf %18, %23 : vector<2x128xf32>
    %c0_i32_24 = arith.constant 0 : i32
    %25 = vector.broadcast %c0_i32_24 : i32 to vector<2x128xi32>
    %26 = arith.cmpi eq, %4, %25 : vector<2x128xi32>
    %27 = arith.select %26, %21, %19 : vector<2x128xi1>, vector<2x128xf32>
    %c0_25 = arith.constant 0 : index
    %c1_26 = arith.constant 1 : index
    %c0_27 = arith.constant 0 : index
    %c0_28 = arith.constant 0 : index
    %28 = vector.load %arg2[%c0_25, %c1_26, %c0_27, %c0_28] : memref<1x4x2x128xf32, #tpu.memory_space<vmem>>, vector<1x1x2x128xf32>
    %29 = vector.shape_cast %28 : vector<1x1x2x128xf32> to vector<2x128xf32>
    %30 = arith.subf %29, %17 : vector<2x128xf32>
    %31 = math.exp %30 : vector<2x128xf32>
    %32 = arith.addf %24, %31 : vector<2x128xf32>
    %c1_i32 = arith.constant 1 : i32
    %33 = vector.broadcast %c1_i32 : i32 to vector<2x128xi32>
    %34 = arith.cmpi eq, %4, %33 : vector<2x128xi32>
    %35 = arith.select %34, %29, %27 : vector<2x128xi1>, vector<2x128xf32>
    %c0_29 = arith.constant 0 : index
    %c2_30 = arith.constant 2 : index
    %c0_31 = arith.constant 0 : index
    %c0_32 = arith.constant 0 : index
    %36 = vector.load %arg2[%c0_29, %c2_30, %c0_31, %c0_32] : memref<1x4x2x128xf32, #tpu.memory_space<vmem>>, vector<1x1x2x128xf32>
    %37 = vector.shape_cast %36 : vector<1x1x2x128xf32> to vector<2x128xf32>
    %38 = arith.subf %37, %17 : vector<2x128xf32>
    %39 = math.exp %38 : vector<2x128xf32>
    %40 = arith.addf %32, %39 : vector<2x128xf32>
    %c2_i32 = arith.constant 2 : i32
    %41 = vector.broadcast %c2_i32 : i32 to vector<2x128xi32>
    %42 = arith.cmpi eq, %4, %41 : vector<2x128xi32>
    %43 = arith.select %42, %37, %35 : vector<2x128xi1>, vector<2x128xf32>
    %c0_33 = arith.constant 0 : index
    %c3_34 = arith.constant 3 : index
    %c0_35 = arith.constant 0 : index
    %c0_36 = arith.constant 0 : index
    %44 = vector.load %arg2[%c0_33, %c3_34, %c0_35, %c0_36] : memref<1x4x2x128xf32, #tpu.memory_space<vmem>>, vector<1x1x2x128xf32>
    %45 = vector.shape_cast %44 : vector<1x1x2x128xf32> to vector<2x128xf32>
    %46 = arith.subf %45, %17 : vector<2x128xf32>
    %47 = math.exp %46 : vector<2x128xf32>
    %48 = arith.addf %40, %47 : vector<2x128xf32>
    %c3_i32 = arith.constant 3 : i32
    %49 = vector.broadcast %c3_i32 : i32 to vector<2x128xi32>
    %50 = arith.cmpi eq, %4, %49 : vector<2x128xi32>
    %51 = arith.select %50, %45, %43 : vector<2x128xi1>, vector<2x128xf32>
    %52 = math.log %48 : vector<2x128xf32>
    %53 = arith.addf %17, %52 : vector<2x128xf32>
    %54 = arith.subf %53, %51 : vector<2x128xf32>
    %cst_37 = arith.constant 8.000000e-01 : f32
    %55 = vector.broadcast %cst_37 : f32 to vector<2x128xf32>
    %56 = arith.cmpf ogt, %6, %55 : vector<2x128xf32>
    %c255_i32 = arith.constant 255 : i32
    %57 = vector.broadcast %c255_i32 : i32 to vector<2x128xi32>
    %58 = arith.cmpi ne, %4, %57 : vector<2x128xi32>
    %59 = arith.andi %56, %58 : vector<2x128xi1>
    %c0_38 = arith.constant 0 : index
    %c0_39 = arith.constant 0 : index
    %60 = vector.load %arg7[%c0_38, %c0_39] : memref<2x128xf32, #tpu.memory_space<vmem>>, vector<2x128xf32>
    %cst_40 = arith.constant 0.000000e+00 : f32
    %61 = vector.broadcast %cst_40 : f32 to vector<2x128xf32>
    %62 = arith.select %59, %54, %61 : vector<2x128xi1>, vector<2x128xf32>
    %63 = arith.addf %60, %62 : vector<2x128xf32>
    %c0_41 = arith.constant 0 : index
    %c0_42 = arith.constant 0 : index
    %64 = vector.load %arg7[%c0_41, %c0_42] : memref<2x128xf32, #tpu.memory_space<vmem>>, vector<2x128xf32>
    tpu.vector_store %arg7[%c0_41, %c0_42], %63 {strides = array<i32>} : memref<2x128xf32, #tpu.memory_space<vmem>>, vector<2x128xf32>,
    %c0_43 = arith.constant 0 : index
    %c0_44 = arith.constant 0 : index
    %65 = vector.load %arg8[%c0_43, %c0_44] : memref<2x128xf32, #tpu.memory_space<vmem>>, vector<2x128xf32>
    %66 = arith.extui %59 : vector<2x128xi1> to vector<2x128xi32>
    %67 = arith.sitofp %66 : vector<2x128xi32> to vector<2x128xf32>
    %68 = arith.addf %65, %67 : vector<2x128xf32>
    %c0_45 = arith.constant 0 : index
    %c0_46 = arith.constant 0 : index
    %69 = vector.load %arg8[%c0_45, %c0_46] : memref<2x128xf32, #tpu.memory_space<vmem>>, vector<2x128xf32>
    tpu.vector_store %arg8[%c0_45, %c0_46], %68 {strides = array<i32>} : memref<2x128xf32, #tpu.memory_space<vmem>>, vector<2x128xf32>,
    %c0_i32_47 = arith.constant 0 : i32
    %70 = arith.cmpi eq, %arg1, %c0_i32_47 : i32
    %71 = arith.extui %70 : i1 to i32
    %c0_i32_48 = arith.constant 0 : i32
    %72 = arith.cmpi ne, %71, %c0_i32_48 : i32
    scf.if %72 {
      %c0_49 = arith.constant 0 : index
      %c0_50 = arith.constant 0 : index
      %73 = vector.load %arg7[%c0_49, %c0_50] : memref<2x128xf32, #tpu.memory_space<vmem>>, vector<2x128xf32>
      %74 = vector.shape_cast %73 : vector<2x128xf32> to vector<1x2x128xf32>
      %cst_51 = arith.constant dense<0.000000e+00> : vector<1xf32>
      %75 = vector.multi_reduction <add>, %74, %cst_51 [1, 2] : vector<1x2x128xf32> to vector<1xf32>
      %76 = vector.shape_cast %75 : vector<1xf32> to vector<1x1x1xf32>
      %77 = vector.extract %76[0, 0, 0] : f32 from vector<1x1x1xf32>
      %78 = vector.broadcast %77 : f32 to vector<1x1x1xf32>
      %c0_52 = arith.constant 0 : index
      %c0_53 = arith.constant 0 : index
      %c0_54 = arith.constant 0 : index
      %79 = vector.load %arg5[%c0_52, %c0_53, %c0_54] : memref<1x1x1xf32, #tpu.memory_space<vmem>>, vector<1x1x1xf32>
      tpu.vector_store %arg5[%c0_52, %c0_53, %c0_54], %78 {strides = array<i32>} : memref<1x1x1xf32, #tpu.memory_space<vmem>>, vector<1x1x1xf32>,
      %c0_55 = arith.constant 0 : index
      %c0_56 = arith.constant 0 : index
      %80 = vector.load %arg8[%c0_55, %c0_56] : memref<2x128xf32, #tpu.memory_space<vmem>>, vector<2x128xf32>
      %81 = vector.shape_cast %80 : vector<2x128xf32> to vector<1x2x128xf32>
      %cst_57 = arith.constant dense<0.000000e+00> : vector<1xf32>
      %82 = vector.multi_reduction <add>, %81, %cst_57 [1, 2] : vector<1x2x128xf32> to vector<1xf32>
      %83 = vector.shape_cast %82 : vector<1xf32> to vector<1x1x1xf32>
      %84 = vector.extract %83[0, 0, 0] : f32 from vector<1x1x1xf32>
      %85 = vector.broadcast %84 : f32 to vector<1x1x1xf32>
      %c0_58 = arith.constant 0 : index
      %c0_59 = arith.constant 0 : index
      %c0_60 = arith.constant 0 : index
      %86 = vector.load %arg6[%c0_58, %c0_59, %c0_60] : memref<1x1x1xf32, #tpu.memory_space<vmem>>, vector<1x1x1xf32>
      tpu.vector_store %arg6[%c0_58, %c0_59, %c0_60], %85 {strides = array<i32>} : memref<1x1x1xf32, #tpu.memory_space<vmem>>, vector<1x1x1xf32>,
    } else {
    }
    return
  }
  func.func @transform_0(%arg0: i32, %arg1: i32) -> (i32, i32, i32, i32) {
    %c0_i32 = arith.constant 0 : i32
    %c0_i32_0 = arith.constant 0 : i32
    %c0_i32_1 = arith.constant 0 : i32
    return %arg0, %c0_i32, %arg1, %c0_i32_0 : i32, i32, i32, i32
  }
  func.func @transform_1(%arg0: i32, %arg1: i32) -> (i32, i32, i32) {
    %c0_i32 = arith.constant 0 : i32
    %c0_i32_0 = arith.constant 0 : i32
    return %arg0, %arg1, %c0_i32 : i32, i32, i32
  }
  func.func @transform_2(%arg0: i32, %arg1: i32) -> (i32, i32, i32) {
    %c0_i32 = arith.constant 0 : i32
    %c0_i32_0 = arith.constant 0 : i32
    return %arg0, %arg1, %c0_i32 : i32, i32, i32
  }
  func.func @transform_3(%arg0: i32, %arg1: i32) -> (i32, i32, i32) {
    %c0_i32 = arith.constant 0 : i32
    %c0_i32_0 = arith.constant 0 : i32
    %c0_i32_1 = arith.constant 0 : i32
    return %arg0, %c0_i32, %c0_i32_0 : i32, i32, i32
  }
  func.func @transform_4(%arg0: i32, %arg1: i32) -> (i32, i32, i32) {
    %c0_i32 = arith.constant 0 : i32
    %c0_i32_0 = arith.constant 0 : i32
    %c0_i32_1 = arith.constant 0 : i32
    return %arg0, %c0_i32, %c0_i32_0 : i32, i32, i32
  }
}

</mosaic_0001>

<llo_original>
// kernel: tpu_custom_call.1
$region0: #{tpu_custom_call.1}
  #allocation0 [shape = 'u32[]', space=smem, size = 0x4, offset = 0x4, fixed_abs, tag = 'smem constant byte address 0x4 - core index']
  #allocation1 [shape = 'u32[144,128]{1,0:T(1,128)}', space=vmem, size = 0x12000, scoped, tag = 'internal scratch']
  #allocation2 [shape = 'f32[2,128]{1,0:T(2,128)}', space=vmem, size = 0x400, scoped, tag = 'scratch operand']
  #allocation3 [shape = 'f32[2,128]{1,0:T(2,128)}', space=vmem, size = 0x400, scoped, tag = 'scratch operand']
  %s0 = inlined_call_operand.hbm [shape: f32[2,4,2,128], index: 0, kind: input, shape index: {}]
  %s1 = inlined_call_operand.hbm [shape: s32[2,2,128], index: 1, kind: input, shape index: {}]
  %s2 = inlined_call_operand.vmem [shape: f32[2,2,128], index: 2, kind: input, shape index: {}]
  %s3 = inlined_call_operand.vmem [shape: f32[2,1,1], index: 3, kind: output, shape index: {0}]
  %s4 = inlined_call_operand.vmem [shape: f32[2,1,1], index: 4, kind: output, shape index: {1}]
  %5 = xla_tuple %s3, %s4
  %s6 = sld [smem:[#allocation0]]
  $region69: #{tpu_custom_call.1} parent=0
    _
  %s8 = ssub.s32 1, %s6
  %s9 = scalar_select 0, %s8, %s6
  $region1: #{tpu_custom_call.1} parent=0
    #allocation4 [shape = 'u8[8192]{0}', space=vmem, size = 0x2000, scoped, tag = 'input window, operand 0']
    #allocation5 [shape = 's32[2]{0}', space=sflag, size = 0x8, scoped, tag = 'scoped memory for tpu_custom_call.1']
    #allocation6 [shape = 'u8[2048]{0}', space=vmem, size = 0x800, scoped, tag = 'input window, operand 1']
    #allocation7 [shape = 's32[2]{0}', space=sflag, size = 0x8, scoped, tag = 'scoped memory for tpu_custom_call.1']
    %10 = vsyncpa [#allocation5], 0
    %s11 = scalar_lea.sflag [#allocation5], 1
    %12 = vsyncpa %s11, 0
    %13 = vsyncpa [#allocation7], 0
    %s14 = scalar_lea.sflag [#allocation7], 1
    %15 = vsyncpa %s14, 0
    loop: start=0, step=1, limit=4
    $region2: #{tpu_custom_call.1} parent=1 // loop_pre_header
      _
    $region3: #{tpu_custom_call.1} parent=1 // loop_header
      %s17 = sphi 0, %s21
      %p18 = scmp.ge.s32.totalorder %s17, 4
      %s24 = sphi 0, %s36
      %s25 = sphi 0, %s32
      %s26 = sphi 0, %s24
      %s27 = sphi 0, %s25
      %s28 = sphi 0, %s26
      %s29 = sphi 0, %s27
      %s41 = sphi 0, %s43
      %s44 = sphi 0, %s41
      %s45 = sphi 0, %s44
      %s61 = sphi 0, %s45
      %s69 = sphi 0, %s71
      %s72 = sphi 0, %s69
      %s73 = sphi 0, %s72
      %s89 = sphi 0, %s73
      %s97 = sphi 0, %s99
      %s100 = sphi 0, %s97
      %s101 = sphi 0, %s100
      %s117 = sphi 0, %s101
      %s123 = sphi 0, %s125
      %s126 = sphi 0, %s123
      %s127 = sphi 0, %s126
      %s143 = sphi 0, %s127
      %s149 = sphi 0, %s151
      %s152 = sphi 0, %s149
      %s153 = sphi 0, %s152
      %s169 = sphi 0, %s153
    $region4: #{tpu_custom_call.1} parent=1 // loop_header_branch
      %20 = sbr.rel (%p18) target = $region8
    $region5: #{tpu_custom_call.1} parent=1 // loop_body
      %s22 = ssub.s32 %s17, 1
      %s23 = ssub.s32 %s17, 2
      %s30 = sadd.s32 1, %s25
      %p31 = scmp.ge.s32.totalorder %s30, 1
      %s32 = scalar_select %p31, 0, %s30
      %s33 = sadd.s32 1, %s24
      %s34 = scalar_select %p31, %s33, %s24
      %p35 = scmp.ge.s32.totalorder %s34, 2
      %s36 = scalar_select %p35, 0, %s34
      %s37 = ssub.s32 %s24, %s36
      %s38 = ssub.s32 %s25, %s32
      %s39 = sor.u32 %s37, %s38
      %p40 = scmp.eq.s32.totalorder %s39, 0
      %s42 = sadd.s32 %s41, 1
      %s43 = scalar_select %p40, %s41, %s42
      %p46 = pneg %p40
      %p47 = scmp.eq.s32.totalorder %s17, 1
      %p48 = por %p46, %p47
      %p49 = scmp.ne.s32.totalorder %s41, %s44
      %p50 = scmp.eq.s32.totalorder %s17, 0
      %p51 = por %p49, %p50
      %p52 = scmp.ne.s32.totalorder %s41, %s44
      %p53 = scmp.eq.s32.totalorder %s22, 1
      %p54 = por %p52, %p53
      %p55 = scmp.ne.s32.totalorder %s44, %s45
      %p56 = scmp.eq.s32.totalorder %s22, 0
      %p57 = por %p55, %p56
      %p58 = scmp.ne.s32.totalorder %s44, %s45
      %p59 = scmp.eq.s32.totalorder %s23, 1
      %p60 = por %p58, %p59
      %p62 = scmp.ne.s32.totalorder %s45, %s61
      %p63 = scmp.eq.s32.totalorder %s23, 0
      %p64 = por %p62, %p63
      %s65 = ssub.s32 %s24, %s36
      %s66 = ssub.s32 %s25, %s32
      %s67 = sor.u32 %s65, %s66
      %p68 = scmp.eq.s32.totalorder %s67, 0
      %s70 = sadd.s32 %s69, 1
      %s71 = scalar_select %p68, %s69, %s70
      %p74 = pneg %p68
      %p75 = scmp.eq.s32.totalorder %s17, 1
      %p76 = por %p74, %p75
      %p77 = scmp.ne.s32.totalorder %s69, %s72
      %p78 = scmp.eq.s32.totalorder %s17, 0
      %p79 = por %p77, %p78
      %p80 = scmp.ne.s32.totalorder %s69, %s72
      %p81 = scmp.eq.s32.totalorder %s22, 1
      %p82 = por %p80, %p81
      %p83 = scmp.ne.s32.totalorder %s72, %s73
      %p84 = scmp.eq.s32.totalorder %s22, 0
      %p85 = por %p83, %p84
      %p86 = scmp.ne.s32.totalorder %s72, %s73
      %p87 = scmp.eq.s32.totalorder %s23, 1
      %p88 = por %p86, %p87
      %p90 = scmp.ne.s32.totalorder %s73, %s89
      %p91 = scmp.eq.s32.totalorder %s23, 0
      %p92 = por %p90, %p91
      %s93 = ssub.s32 %s24, %s36
      %s94 = ssub.s32 %s25, %s32
      %s95 = sor.u32 %s93, %s94
      %p96 = scmp.eq.s32.totalorder %s95, 0
      %s98 = sadd.s32 %s97, 1
      %s99 = scalar_select %p96, %s97, %s98
      %p102 = pneg %p96
      %p103 = scmp.eq.s32.totalorder %s17, 1
      %p104 = por %p102, %p103
      %p105 = scmp.ne.s32.totalorder %s97, %s100
      %p106 = scmp.eq.s32.totalorder %s17, 0
      %p107 = por %p105, %p106
      %p108 = scmp.ne.s32.totalorder %s97, %s100
      %p109 = scmp.eq.s32.totalorder %s22, 1
      %p110 = por %p108, %p109
      %p111 = scmp.ne.s32.totalorder %s100, %s101
      %p112 = scmp.eq.s32.totalorder %s22, 0
      %p113 = por %p111, %p112
      %p114 = scmp.ne.s32.totalorder %s100, %s101
      %p115 = scmp.eq.s32.totalorder %s23, 1
      %p116 = por %p114, %p115
      %p118 = scmp.ne.s32.totalorder %s101, %s117
      %p119 = scmp.eq.s32.totalorder %s23, 0
      %p120 = por %p118, %p119
      %s121 = ssub.s32 %s24, %s36
      %p122 = scmp.eq.s32.totalorder %s121, 0
      %s124 = sadd.s32 %s123, 1
      %s125 = scalar_select %p122, %s123, %s124
      %p128 = pneg %p122
      %p129 = scmp.eq.s32.totalorder %s17, 1
      %p130 = por %p128, %p129
      %p131 = scmp.ne.s32.totalorder %s123, %s126
      %p132 = scmp.eq.s32.totalorder %s17, 0
      %p133 = por %p131, %p132
      %p134 = scmp.ne.s32.totalorder %s123, %s126
      %p135 = scmp.eq.s32.totalorder %s22, 1
      %p136 = por %p134, %p135
      %p137 = scmp.ne.s32.totalorder %s126, %s127
      %p138 = scmp.eq.s32.totalorder %s22, 0
      %p139 = por %p137, %p138
      %p140 = scmp.ne.s32.totalorder %s126, %s127
      %p141 = scmp.eq.s32.totalorder %s23, 1
      %p142 = por %p140, %p141
      %p144 = scmp.ne.s32.totalorder %s127, %s143
      %p145 = scmp.eq.s32.totalorder %s23, 0
      %p146 = por %p144, %p145
      %s147 = ssub.s32 %s24, %s36
      %p148 = scmp.eq.s32.totalorder %s147, 0
      %s150 = sadd.s32 %s149, 1
      %s151 = scalar_select %p148, %s149, %s150
      %p154 = pneg %p148
      %p155 = scmp.eq.s32.totalorder %s17, 1
      %p156 = por %p154, %p155
      %p157 = scmp.ne.s32.totalorder %s149, %s152
      %p158 = scmp.eq.s32.totalorder %s17, 0
      %p159 = por %p157, %p158
      %p160 = scmp.ne.s32.totalorder %s149, %s152
      %p161 = scmp.eq.s32.totalorder %s22, 1
      %p162 = por %p160, %p161
      %p163 = scmp.ne.s32.totalorder %s152, %s153
      %p164 = scmp.eq.s32.totalorder %s22, 0
      %p165 = por %p163, %p164
      %p166 = scmp.ne.s32.totalorder %s152, %s153
      %p167 = scmp.eq.s32.totalorder %s23, 1
      %p168 = por %p166, %p167
      %p170 = scmp.ne.s32.totalorder %s153, %s169
      %p171 = scmp.eq.s32.totalorder %s23, 0
      %p172 = por %p170, %p171
      %p173 = scmp.le.s32.totalorder 1, %s17
      %p174 = scmp.lt.s32.totalorder %s17, 3
      %p175 = pnand %p173, %p174
      %p176 = pneg %p175
      // Predicated region
      $region9: #{tpu_custom_call.1} parent=5 // pred_check
        _
      $region10: #{tpu_custom_call.1} parent=5 // pred_check_branch
        %178 = sbr.rel (%p175) target = $region12
      $region11: #{tpu_custom_call.1} parent=5 // pred_region
        %s179 = ssub.s32 %s17, 1
      $region12: #{tpu_custom_call.1} parent=5 // pred_fallthru
        _
      %p180 = scmp.lt.s32.totalorder %s17, 2
      // Predicated region
      $region13: #{tpu_custom_call.1} parent=5 // pred_check
        %p181 = pneg %p180
      $region14: #{tpu_custom_call.1} parent=5 // pred_check_branch
        %183 = sbr.rel (%p181) target = $region16
      $region15: #{tpu_custom_call.1} parent=5 // pred_region
        // Predicated region
        $region17: #{tpu_custom_call.1} parent=15 // pred_check
          %p184 = pneg %p51
        $region18: #{tpu_custom_call.1} parent=15 // pred_check_branch
          %186 = sbr.rel (%p184) target = $region20
        $region19: #{tpu_custom_call.1} parent=15 // pred_region
          %s187 = sand.u32 %s41, 1
          %s188 = scalar_lea.sflag [#allocation5], %s187
          %s189 = sand.u32 %s41, 1
          %s190 = smul.addr %s189, 8
          %s191 = scalar_lea.vmem [#allocation4], %s190
          %s193 = ssub.s32 128, 128
          %194 = vsyncadd %s188, %s193
          %s195 = smul.addr %s24, 4
          %s196 = sadd.s32 %s25, %s195
          %s197 = smul.addr %s196, 32
          %s198 = scalar_lea.hbm %s0, %s197
          %s199 = sshll.u32 %s191, 4
          %s200 = int_to_ptr.vmem [resolvable:$true] %s199
          %205 = dma.hbm_to_vmem [thread:$0]  %s198, 128, %s200, %s188, 32, 32, 2
        $region20: #{tpu_custom_call.1} parent=15 // pred_fallthru
          _
        // Predicated region
        $region21: #{tpu_custom_call.1} parent=15 // pred_check
          %p206 = pneg %p79
        $region22: #{tpu_custom_call.1} parent=15 // pred_check_branch
          %208 = sbr.rel (%p206) target = $region24
        $region23: #{tpu_custom_call.1} parent=15 // pred_region
          %s209 = sand.u32 %s69, 1
          %s210 = scalar_lea.sflag [#allocation7], %s209
          %s211 = sand.u32 %s69, 1
          %s212 = smul.addr %s211, 2
          %s213 = scalar_lea.vmem [#allocation6], %s212
          %s215 = ssub.s32 32, 32
          %216 = vsyncadd %s210, %s215
          %s217 = sadd.s32 %s25, %s24
          %s218 = smul.addr %s217, 32
          %s219 = scalar_lea.hbm %s1, %s218
          %s221 = sshll.u32 %s213, 4
          %s222 = int_to_ptr.vmem [resolvable:$true] %s221
          %224 = dma.hbm_to_vmem [thread:$0]  %s219, 32, %s222, %s210
        $region24: #{tpu_custom_call.1} parent=15 // pred_fallthru
          _
        // Predicated region
        $region25: #{tpu_custom_call.1} parent=15 // pred_check
          %p225 = pneg %p107
        $region26: #{tpu_custom_call.1} parent=15 // pred_check_branch
          %227 = sbr.rel (%p225) target = $region28
        $region27: #{tpu_custom_call.1} parent=15 // pred_region
          %p228 = scmp.lt.s32.totalorder %s24, 1
          %s229 = scalar_select %p228, %s24, 1
          %p230 = scmp.lt.s32.totalorder %s25, 0
          %s231 = scalar_select %p230, %s25, 0
          %s232 = sadd.s32 %s231, %s229
          %s233 = smul.addr %s232, 2
          %s234 = scalar_lea.vmem %s2, %s233
        $region28: #{tpu_custom_call.1} parent=15 // pred_fallthru
          _
      $region16: #{tpu_custom_call.1} parent=5 // pred_fallthru
        _
      %p235 = scmp.le.s32.totalorder 1, %s17
      %p236 = scmp.lt.s32.totalorder %s17, 3
      %p237 = pnand %p235, %p236
      %p238 = pneg %p237
      // Predicated region
      $region29: #{tpu_custom_call.1} parent=5 // pred_check
        _
      $region30: #{tpu_custom_call.1} parent=5 // pred_check_branch
        %240 = sbr.rel (%p237) target = $region32
      $region31: #{tpu_custom_call.1} parent=5 // pred_region
        %s241 = ssub.s32 %s17, 1
        %s242 = sand.u32 %s44, 1
        %s243 = scalar_lea.sflag [#allocation5], %s242
        %s244 = sand.u32 %s44, 1
        %s245 = smul.addr %s244, 8
        %s246 = scalar_lea.vmem [#allocation4], %s245
        // Predicated region
        $region33: #{tpu_custom_call.1} parent=31 // pred_check
          %p247 = pneg %p57
        $region34: #{tpu_custom_call.1} parent=31 // pred_check_branch
          %249 = sbr.rel (%p247) target = $region36
        $region35: #{tpu_custom_call.1} parent=31 // pred_region
          %250 = dma.done %s243, 128
        $region36: #{tpu_custom_call.1} parent=31 // pred_fallthru
          _
        %s251 = sand.u32 %s72, 1
        %s252 = scalar_lea.sflag [#allocation7], %s251
        %s253 = sand.u32 %s72, 1
        %s254 = smul.addr %s253, 2
        %s255 = scalar_lea.vmem [#allocation6], %s254
        // Predicated region
        $region37: #{tpu_custom_call.1} parent=31 // pred_check
          %p256 = pneg %p85
        $region38: #{tpu_custom_call.1} parent=31 // pred_check_branch
          %258 = sbr.rel (%p256) target = $region40
        $region39: #{tpu_custom_call.1} parent=31 // pred_region
          %259 = dma.done %s252, 32
        $region40: #{tpu_custom_call.1} parent=31 // pred_fallthru
          _
        %s260 = sand.u32 %s44, 1
        %s261 = scalar_lea.sflag [#allocation5], %s260
        %s262 = sand.u32 %s44, 1
        %s263 = smul.addr %s262, 8
        %s264 = scalar_lea.vmem [#allocation4], %s263
        %p265 = pneg %p57
        %p266 = pneg %p54
        %s267 = sand.u32 %s72, 1
        %s268 = scalar_lea.sflag [#allocation7], %s267
        %s269 = sand.u32 %s72, 1
        %s270 = smul.addr %s269, 2
        %s271 = scalar_lea.vmem [#allocation6], %s270
        %p272 = pneg %p85
        %p273 = pneg %p82
        %p274 = scmp.lt.s32.totalorder %s26, 1
        %s275 = scalar_select %p274, %s26, 1
        %p276 = scmp.lt.s32.totalorder %s27, 0
        %s277 = scalar_select %p276, %s27, 0
        %s278 = sadd.s32 %s277, %s275
        %s279 = smul.addr %s278, 2
        %s280 = scalar_lea.vmem %s2, %s279
        %p281 = pneg %p113
        %p282 = pneg %p110
        %p283 = pneg %p139
        %p284 = pneg %p136
        %p285 = scmp.lt.s32.totalorder %s26, 1
        %s286 = scalar_select %p285, %s26, 1
        %s287 = scalar_lea.vmem %s3, %s286
        %p288 = pneg %p165
        %p289 = pneg %p162
        %p290 = scmp.lt.s32.totalorder %s26, 1
        %s291 = scalar_select %p290, %s26, 1
        %s292 = scalar_lea.vmem %s4, %s291
        %p293 = scmp.lt.s32.totalorder %s26, 1
        %s294 = scalar_select %p293, %s26, 1
        %p295 = scmp.lt.s32.totalorder %s27, 0
        %s296 = scalar_select %p295, %s27, 0
        %s297 = sadd.s32 %s296, %s294
        %s298 = smul.addr %s297, 2
        %s299 = scalar_lea.vmem %s2, %s298
        %p300 = scmp.lt.s32.totalorder %s26, 1
        %s301 = scalar_select %p300, %s26, 1
        %s302 = scalar_lea.vmem %s3, %s301
        %p303 = scmp.lt.s32.totalorder %s26, 1
        %s304 = scalar_select %p303, %s26, 1
        %s305 = scalar_lea.vmem %s4, %s304
        %p306 = scmp.eq.s32.totalorder %s27, 0
        // Predicated region
        $region41: #{tpu_custom_call.1} parent=31 // pred_check
          %p307 = pneg %p306
        $region42: #{tpu_custom_call.1} parent=31 // pred_check_branch
          %309 = sbr.rel (%p307) target = $region44
        $region43: #{tpu_custom_call.1} parent=31 // pred_region
          %310 = vst [vmem:[#allocation2] sm:$0x3] 0.0
          %311 = vst [vmem:[#allocation3] sm:$0x3] 0.0
        $region44: #{tpu_custom_call.1} parent=31 // pred_fallthru
          _
        %v312 = vld [vmem:[%s255] sm:$0x3]
        %v313 = vld [vmem:[%s299] sm:$0x3]
        %v314 = vld [vmem:[%s246] sm:$0x3]
        %s315 = scalar_lea.vmem %s246, 2 [#allocation4]
        %v316 = vld [vmem:[%s315] sm:$0x3]
        %v317 = vmax.f32 %v314, %v316
        %s318 = scalar_lea.vmem %s246, 4 [#allocation4]
        %v319 = vld [vmem:[%s318] sm:$0x3]
        %v320 = vmax.f32 %v317, %v319
        %s321 = scalar_lea.vmem %s246, 6 [#allocation4]
        %v322 = vld [vmem:[%s321] sm:$0x3]
        %v323 = vmax.f32 %v320, %v322
        %v324 = vsub.f32 %v314, %v323
        %v325 = vmul.f32 %v324, 1.442695
        %v326 = vpow.pop %v325
        %v327 = vadd.f32 %v326, 0.0
        %vm328 = vcmp.eq.s32.totalorder %v312, 0
        %v329 = vsel %vm328, %v314, 0.0
        %v330 = vsub.f32 %v316, %v323
        %v331 = vmul.f32 %v330, 1.442695
        %v332 = vpow.pop %v331
        %v333 = vadd.f32 %v327, %v332
        %vm334 = vcmp.eq.s32.totalorder %v312, 1
        %v335 = vsel %vm334, %v316, %v329
        %v336 = vsub.f32 %v319, %v323
        %v337 = vmul.f32 %v336, 1.442695
        %v338 = vpow.pop %v337
        %v339 = vadd.f32 %v333, %v338
        %vm340 = vcmp.eq.s32.totalorder %v312, 2
        %v341 = vsel %vm340, %v319, %v335
        %v342 = vsub.f32 %v322, %v323
        %v343 = vmul.f32 %v342, 1.442695
        %v344 = vpow.pop %v343
        %v345 = vadd.f32 %v339, %v344
        %vm346 = vcmp.eq.s32.totalorder %v312, 3
        %v347 = vsel %vm346, %v322, %v341
        %v348 = vlog2.pop %v345
        %v349 = vmul.f32 %v348, 0.6931472
        %v350 = vadd.f32 %v323, %v349
        %v351 = vsub.f32 %v350, %v347
        %vm352 = vcmp.gt.f32.partialorder %v313, 0.8
        %vm353 = vcmp.ne.s32.totalorder %v312, 255
        %vm354 = vmand %vm352, %vm353
        %v355 = vld [vmem:[#allocation2] sm:$0x3]
        %v356 = vsel %vm354, %v351, 0.0
        %v357 = vadd.f32 %v355, %v356
        %358 = vst [vmem:[#allocation2] sm:$0x3] %v357
        %v359 = vld [vmem:[#allocation3] sm:$0x3]
        %v360 = vsel %vm354, 1, 0
        %v361 = vcvt.s32.f32 %v360
        %v362 = vadd.f32 %v359, %v361
        %363 = vst [vmem:[#allocation3] sm:$0x3] %v362
        // Predicated region
        $region45: #{tpu_custom_call.1} parent=31 // pred_check
          %p364 = pneg %p306
        $region46: #{tpu_custom_call.1} parent=31 // pred_check_branch
          %366 = sbr.rel (%p364) target = $region48
        $region47: #{tpu_custom_call.1} parent=31 // pred_region
          %v367 = vld [vmem:[#allocation2] sm:$0x3]
          %vm368 = vcmask 1041408
          %v369 = vsel %vm368, %v367, 0.0
          %370 = vadd.xlane.f32.xlu0 %v369
          %v371 = vpop.xlane.xlu0 %370
          %v372 = vrot.slane %v371, 4
          %v373 = vadd.f32 %v371, %v372
          %v374 = vrot.slane %v373, 2
          %v375 = vadd.f32 %v373, %v374
          %v376 = vrot.slane %v375, 1
          %v377 = vadd.f32 %v375, %v376
          %s378 = vtos %v377
          %v379 = vstv %s378
          %vm380 = vcmask 0
          %381 = vst.msk [vmem:[%s302] sm:$0x1] %vm380, %v379
          %v382 = vld [vmem:[#allocation3] sm:$0x3]
          %v383 = vsel %vm368, %v382, 0.0
          %384 = vadd.xlane.f32.xlu0 %v383
          %v385 = vpop.xlane.xlu0 %384
          %v386 = vrot.slane %v385, 4
          %v387 = vadd.f32 %v385, %v386
          %v388 = vrot.slane %v387, 2
          %v389 = vadd.f32 %v387, %v388
          %v390 = vrot.slane %v389, 1
          %v391 = vadd.f32 %v389, %v390
          %s392 = vtos %v391
          %v393 = vstv %s392
          %394 = vst.msk [vmem:[%s305] sm:$0x1] %vm380, %v393
        $region48: #{tpu_custom_call.1} parent=31 // pred_fallthru
          _
        %p395 = scmp.lt.s32.totalorder %s26, 1
        %s396 = scalar_select %p395, %s26, 1
        %s397 = scalar_lea.vmem %s3, %s396
        %p398 = scmp.lt.s32.totalorder %s26, 1
        %s399 = scalar_select %p398, %s26, 1
        %s400 = scalar_lea.vmem %s4, %s399
        // Predicated region
        $region49: #{tpu_custom_call.1} parent=31 // pred_check
          %p401 = pneg %p136
        $region50: #{tpu_custom_call.1} parent=31 // pred_check_branch
          %403 = sbr.rel (%p401) target = $region52
        $region51: #{tpu_custom_call.1} parent=31 // pred_region
          _
        $region52: #{tpu_custom_call.1} parent=31 // pred_fallthru
          _
        // Predicated region
        $region53: #{tpu_custom_call.1} parent=31 // pred_check
          %p404 = pneg %p162
        $region54: #{tpu_custom_call.1} parent=31 // pred_check_branch
          %406 = sbr.rel (%p404) target = $region56
        $region55: #{tpu_custom_call.1} parent=31 // pred_region
          _
        $region56: #{tpu_custom_call.1} parent=31 // pred_fallthru
          _
      $region32: #{tpu_custom_call.1} parent=5 // pred_fallthru
        _
      %p407 = scmp.le.s32.totalorder 2, %s17
      // Predicated region
      $region57: #{tpu_custom_call.1} parent=5 // pred_check
        %p408 = pneg %p407
      $region58: #{tpu_custom_call.1} parent=5 // pred_check_branch
        %410 = sbr.rel (%p408) target = $region60
      $region59: #{tpu_custom_call.1} parent=5 // pred_region
        %s411 = ssub.s32 %s17, 2
        // Predicated region
        $region61: #{tpu_custom_call.1} parent=59 // pred_check
          %p412 = pneg %p142
        $region62: #{tpu_custom_call.1} parent=59 // pred_check_branch
          %414 = sbr.rel (%p412) target = $region64
        $region63: #{tpu_custom_call.1} parent=59 // pred_region
          %p415 = scmp.lt.s32.totalorder %s28, 1
          %s416 = scalar_select %p415, %s28, 1
          %s417 = scalar_lea.vmem %s3, %s416
        $region64: #{tpu_custom_call.1} parent=59 // pred_fallthru
          _
        // Predicated region
        $region65: #{tpu_custom_call.1} parent=59 // pred_check
          %p418 = pneg %p168
        $region66: #{tpu_custom_call.1} parent=59 // pred_check_branch
          %420 = sbr.rel (%p418) target = $region68
        $region67: #{tpu_custom_call.1} parent=59 // pred_region
          %p421 = scmp.lt.s32.totalorder %s28, 1
          %s422 = scalar_select %p421, %s28, 1
          %s423 = scalar_lea.vmem %s4, %s422
        $region68: #{tpu_custom_call.1} parent=59 // pred_fallthru
          _
      $region60: #{tpu_custom_call.1} parent=5 // pred_fallthru
        _
    $region6: #{tpu_custom_call.1} parent=1 // loop_footer
      %s21 = sadd.s32 1, %s17
    $region7: #{tpu_custom_call.1} parent=1 // loop_footer_branch
      %16 = sbr.rel target = $region3
    $region8: #{tpu_custom_call.1} parent=1 // loop_exit
      _
    %424 = vsyncpa [#allocation5], 1
    %s425 = scalar_lea.sflag [#allocation5], 1
    %426 = vsyncpa %s425, 1
    %427 = vsyncpa [#allocation7], 1
    %s428 = scalar_lea.sflag [#allocation7], 1
    %429 = vsyncpa %s428, 1

</llo_original>
